<compile_context>
chip_gen: v7x
topology: tpu7x:2x2x1
jax: 0.10.0
libtpu: 0.0.40
codegen_flags: <defaults>
</compile_context>

<pallas_src>
import math
import functools

import jax
import jax.numpy as jnp
from jax.experimental import pallas as pl
from jax.experimental.pallas import tpu as pltpu


# -----------------------------------------------------------------------------
# Fused GhostModule kernel (Nb batch images per grid step)
# -----------------------------------------------------------------------------
def _ghost_fused_kernel(x_ref, w1_ref, s1_ref, b1_ref, w2_ref, s2_ref, b2_ref,
                        o_ref, *, H, W, Nb, Cinit, oup, mxu_dtype):
    """Fused GhostModule forward for Nb batch images.

    x_ref : (Nb, Cin, H*W)   input, channels on sublanes, pixels on lanes
    w1_ref: (Cinit, Cin)     primary 1x1 conv weight
    s1/b1 : (Cinit, 1)       folded BN scale / shift for the primary conv
    w2_ref: (Cinit, 9)       depthwise 3x3 weights, the 9 taps on the lane axis
    s2/b2 : (Cinit, 1)       folded BN scale / shift for the cheap op
    o_ref : (Nb, oup, H*W)   [x1 ; x2][:oup] per image
    """
    HW = H * W
    L = Nb * HW

    # ---- gather the Nb images of this block onto one fat lane axis ----------
    if Nb == 1:
        x = x_ref[0]                                            # (Cin, HW)
    else:
        x = jnp.concatenate([x_ref[b] for b in range(Nb)], axis=1)  # (Cin, L)

    # ---- primary conv: fat 1x1 conv (single MXU matmul) + BN + ReLU ---------
    y1 = jnp.dot(w1_ref[...].astype(mxu_dtype), x.astype(mxu_dtype),
                 preferred_element_type=jnp.float32)            # (Cinit, L)
    x1 = jnp.maximum(y1 * s1_ref[...] + b1_ref[...], 0.0)       # f32

    # ---- per-image boundary masks, computed ONCE per step -------------------
    # Only `% HW` (skipped when Nb == 1) and `% W` are needed; no `//`.
    col = jax.lax.broadcasted_iota(jnp.int32, (1, L), 1)
    local = col if Nb == 1 else col % HW        # pixel index within its image
    wcol = local % W
    row_ok = {-1: local >= W,        0: None, 1: local < (HW - W)}   # h>=1 / h<=H-2
    col_ok = {-1: wcol >= 1,         0: None, 1: wcol <= (W - 2)}    # w>=1 / w<=W-2

    # ---- cheap op: depthwise 3x3, pad=1, via lane rolls + boundary masks ----
    # Rolling the lane-concatenated activation can pull pixels from the
    # neighbouring image, but exactly those lanes are zeroed by the per-image
    # masks above (== zero padding), so the result is correct per image.
    w2 = w2_ref[...]                                            # (Cinit, 9), one load
    acc = jnp.zeros((Cinit, L), jnp.float32)
    for ky in range(3):
        dy = ky - 1
        for kx in range(3):
            dx = kx - 1
            s = dy * W + dx                  # flattened-pixel offset of the tap
            shifted = x1 if s == 0 else pltpu.roll(x1, shift=(-s) % L, axis=1)
            rm, cm = row_ok[dy], col_ok[dx]
            if rm is None and cm is None:                       # centre tap
                masked = shifted
            else:
                valid = rm if cm is None else (cm if rm is None else rm & cm)
                masked = jnp.where(valid, shifted, 0.0)
            tap = w2[:, ky * 3 + kx: ky * 3 + kx + 1]           # (Cinit, 1)
            acc = acc + masked * tap
    x2 = jnp.maximum(acc * s2_ref[...] + b2_ref[...], 0.0)      # (Cinit, L) f32

    # ---- fused concat + channel trim + one store per image ------------------
    out_all = jnp.concatenate([x1, x2], axis=0)                 # (2*Cinit, L)
    for b in range(Nb):
        o_ref[b] = out_all[:oup, b * HW:(b + 1) * HW].astype(o_ref.dtype)


# -----------------------------------------------------------------------------
# Wrapper: block sizing + pallas_call
# -----------------------------------------------------------------------------
def _pick_vmem_limit():
    """96 MiB on 128-MiB-VMEM chips (v5e/v6e); keep the 32 MiB default on
    64-MiB-VMEM chips (v7x-class)."""
    try:
        cap = int(pltpu.get_tpu_info().vmem_capacity_bytes)
    except Exception:  # query unavailable (older jax / interpret mode)
        cap = 64 * 1024 * 1024
    return 96 * 1024 * 1024 if cap >= 128 * 1024 * 1024 else 32 * 1024 * 1024


def _pick_images_per_step(N, Cin, Cinit, oup, HW, in_itemsize, vmem_limit_bytes):
    """Largest divisor of N whose per-step footprint (double-buffered in/out
    blocks + f32 intermediates) fits in ~half the VMEM budget, while keeping
    >= 2 grid steps when N >= 2 (both v7x TensorCores + pipeline overlap)."""
    budget = vmem_limit_bytes // 2
    best = 1
    for nb in range(1, N + 1):
        if N % nb:
            continue
        if N >= 2 and N // nb < 2:
            continue
        blocks = 2 * nb * HW * in_itemsize * (Cin + oup)   # double-buffered I/O
        temps = 8 * Cinit * nb * HW * 4                    # x, x1, x2, acc, shifted...
        if blocks + temps <= budget:
            best = nb
    return best


def ghost_module_pallas(x_nchw, w_primary, scale1, shift1, w_cheap, scale2,
                        shift2, *, oup, mxu_dtype=jnp.float32):
    """GhostModule forward. x_nchw: (N, Cin, H, W) -> (N, oup, H, W)."""
    N, Cin, H, W = x_nchw.shape
    Cinit = w_primary.shape[0]
    HW = H * W

    x_flat = x_nchw.reshape(N, Cin, HW)          # free row-major reshape
    w2 = w_cheap.reshape(Cinit, 9)
    s1 = scale1.reshape(Cinit, 1)
    b1 = shift1.reshape(Cinit, 1)
    s2 = scale2.reshape(Cinit, 1)
    b2 = shift2.reshape(Cinit, 1)

    vmem_limit = _pick_vmem_limit()
    Nb = _pick_images_per_step(N, Cin, Cinit, oup, HW,
                               x_nchw.dtype.itemsize, vmem_limit)

    kernel = functools.partial(_ghost_fused_kernel, H=H, W=W, Nb=Nb,
                               Cinit=Cinit, oup=oup, mxu_dtype=mxu_dtype)

    # TODO(synk): for single very large images (H*W*Cinit f32 approaching the
    # VMEM budget, esp. v7x's 64 MiB), add a second "parallel" grid axis that
    # tiles H with a 1-row halo (recomputing the halo rows of x1) instead of
    # holding whole images per step; also pad Cinit up to the sublane tile (8
    # for f32) if tiny channel counts are used in production.
    out_flat = pl.pallas_call(
        kernel,
        out_shape=jax.ShapeDtypeStruct((N, oup, HW), x_nchw.dtype),
        grid=(N // Nb,),
        in_specs=[
            pl.BlockSpec((Nb, Cin, HW), lambda g: (g, 0, 0)),
            pl.BlockSpec((Cinit, Cin), lambda g: (0, 0)),
            pl.BlockSpec((Cinit, 1), lambda g: (0, 0)),
            pl.BlockSpec((Cinit, 1), lambda g: (0, 0)),
            pl.BlockSpec((Cinit, 9), lambda g: (0, 0)),
            pl.BlockSpec((Cinit, 1), lambda g: (0, 0)),
            pl.BlockSpec((Cinit, 1), lambda g: (0, 0)),
        ],
        out_specs=pl.BlockSpec((Nb, oup, HW), lambda g: (g, 0, 0)),
        compiler_params=pltpu.CompilerParams(
            dimension_semantics=("parallel",),
            vmem_limit_bytes=vmem_limit,
        ),
    )(x_flat, w_primary, s1, b1, w2, s2, b2)

    return out_flat.reshape(N, oup, H, W)        # free row-major reshape


@functools.partial(jax.jit, static_argnames=("oup", "mxu_dtype"))
def ghost_module_forward(x_nchw, w_primary, scale1, shift1, w_cheap, scale2,
                         shift2, *, oup, mxu_dtype=jnp.float32):
    return ghost_module_pallas(x_nchw, w_primary, scale1, shift1,
                               w_cheap, scale2, shift2,
                               oup=oup, mxu_dtype=mxu_dtype)


# -----------------------------------------------------------------------------
# Parameter construction (eval-mode BN folded to scale/shift)
# -----------------------------------------------------------------------------
def make_ghost_params(key, inp, oup, kernel_size=1, ratio=2, dw_size=3):
    assert kernel_size == 1 and ratio == 2 and dw_size == 3, \
        "this synthetic kernel implements the default GhostModule config"
    init_channels = math.ceil(oup / ratio)
    new_channels = init_channels * (ratio - 1)

    k = jax.random.split(key, 6)
    # primary 1x1 conv weight, torch layout (Cout, Cin, 1, 1) -> stored (Cout, Cin)
    w_primary = 0.1 * jax.random.normal(k[0], (init_channels, inp), jnp.float32)
    # depthwise 3x3 conv weight, torch layout (C, 1, 3, 3) -> stored (C, 3, 3)
    w_cheap = 0.1 * jax.random.normal(k[1], (init_channels, dw_size, dw_size),
                                      jnp.float32)

    eps = 1e-5
    gamma1 = 1.0 + 0.1 * jax.random.normal(k[2], (init_channels,), jnp.float32)
    beta1 = 0.1 * jax.random.normal(k[3], (init_channels,), jnp.float32)
    mean1 = jnp.zeros((init_channels,), jnp.float32)
    var1 = jnp.ones((init_channels,), jnp.float32)
    scale1 = gamma1 / jnp.sqrt(var1 + eps)
    shift1 = beta1 - mean1 * scale1

    gamma2 = 1.0 + 0.1 * jax.random.normal(k[4], (new_channels,), jnp.float32)
    beta2 = 0.1 * jax.random.normal(k[5], (new_channels,), jnp.float32)
    mean2 = jnp.zeros((new_channels,), jnp.float32)
    var2 = jnp.ones((new_channels,), jnp.float32)
    scale2 = gamma2 / jnp.sqrt(var2 + eps)
    shift2 = beta2 - mean2 * scale2

    return dict(oup=oup, w_primary=w_primary, scale1=scale1, shift1=shift1,
                w_cheap=w_cheap, scale2=scale2, shift2=shift2)


# -----------------------------------------------------------------------------
# Plain-JAX reference (direct 9-tap padded conv, independent formulation)
# -----------------------------------------------------------------------------
def ghost_module_ref(x_nchw, p):
    x = jnp.transpose(x_nchw, (0, 2, 3, 1))                    # NHWC
    x1 = jnp.einsum("nhwc,dc->nhwd", x, p["w_primary"])
    x1 = jnp.maximum(x1 * p["scale1"] + p["shift1"], 0.0)
    xp = jnp.pad(x1, ((0, 0), (1, 1), (1, 1), (0, 0)))
    H, W = x1.shape[1], x1.shape[2]
    acc = jnp.zeros_like(x1)
    for ky in range(3):
        for kx in range(3):
            acc = acc + xp[:, ky:ky + H, kx:kx + W, :] * p["w_cheap"][:, ky, kx]
    x2 = jnp.maximum(acc * p["scale2"] + p["shift2"], 0.0)
    out = jnp.concatenate([x1, x2], axis=-1)[..., :p["oup"]]
    return jnp.transpose(out, (0, 3, 1, 2))                    # back to NCHW


if __name__ == "__main__":
    key = jax.random.PRNGKey(0)
    k_x, k_p, k_x2, k_p2 = jax.random.split(key, 4)

    # Case A: even oup; N=4 exercises the multi-image-per-step path (Nb=2,
    # grid of 2 "parallel" steps) with f32 MXU operands.
    N, Cin, H, W, oup = 4, 4, 16, 16, 8
    x = jax.random.normal(k_x, (N, Cin, H, W), jnp.float32)
    params = make_ghost_params(k_p, inp=Cin, oup=oup)

    out = ghost_module_forward(
        x,
        params["w_primary"], params["scale1"], params["shift1"],
        params["w_cheap"], params["scale2"], params["shift2"],
        oup=oup)
    out = jax.block_until_ready(out)
    ref = ghost_module_ref(x, params)
    assert out.shape == (N, oup, H, W), out.shape
    assert jnp.allclose(out, ref, atol=1e-4, rtol=1e-4), "f32 mismatch vs ref"

    # Case A with bf16 MXU operands (v6e/v7x recommendation); looser tolerance.
    out_bf16 = jax.block_until_ready(ghost_module_forward(
        x,
        params["w_primary"], params["scale1"], params["shift1"],
        params["w_cheap"], params["scale2"], params["shift2"],
        oup=oup, mxu_dtype=jnp.bfloat16))
    assert jnp.allclose(out_bf16, ref, atol=5e-2, rtol=5e-2), "bf16 mismatch"

    # Case B: odd oup exercises the in-kernel channel trim (no wrapper slice).
    N2, Cin2, oup2 = 2, 4, 7
    x2 = jax.random.normal(k_x2, (N2, Cin2, H, W), jnp.float32)
    params2 = make_ghost_params(k_p2, inp=Cin2, oup=oup2)
    out2 = jax.block_until_ready(ghost_module_forward(
        x2,
        params2["w_primary"], params2["scale1"], params2["shift1"],
        params2["w_cheap"], params2["scale2"], params2["shift2"],
        oup=oup2))
    ref2 = ghost_module_ref(x2, params2)
    assert out2.shape == (N2, oup2, H, W), out2.shape
    assert jnp.allclose(out2, ref2, atol=1e-4, rtol=1e-4), "odd-oup mismatch"

    print("KERNEL_OK")
</pallas_src>

<mosaic_0001>
module attributes {stable_mosaic.version = 11 : i64} {
  func.func @_ghost_fused_kernel(%arg0: i32, %arg1: memref<2x4x256xf32, #tpu.memory_space<vmem>>, %arg2: memref<4x4xf32, #tpu.memory_space<vmem>>, %arg3: memref<4x1xf32, #tpu.memory_space<vmem>>, %arg4: memref<4x1xf32, #tpu.memory_space<vmem>>, %arg5: memref<4x9xf32, #tpu.memory_space<vmem>>, %arg6: memref<4x1xf32, #tpu.memory_space<vmem>>, %arg7: memref<4x1xf32, #tpu.memory_space<vmem>>, %arg8: memref<2x8x256xf32, #tpu.memory_space<vmem>>) attributes {dimension_semantics = [#tpu.dimension_semantics<parallel>], iteration_bounds = array<i64: 2>, scalar_prefetch = 0 : i64, scratch_operands = 0 : i64, tpu.core_type = #tpu.core_type<tc>, window_params = [{transform_indices = @transform_0, window_bounds = array<i64: 2, 4, 256>}, {pipeline_mode = #tpu.pipeline_mode<synchronous>, transform_indices = @transform_1, window_bounds = array<i64: 4, 4>}, {pipeline_mode = #tpu.pipeline_mode<synchronous>, transform_indices = @transform_2, window_bounds = array<i64: 4, 1>}, {pipeline_mode = #tpu.pipeline_mode<synchronous>, transform_indices = @transform_3, window_bounds = array<i64: 4, 1>}, {pipeline_mode = #tpu.pipeline_mode<synchronous>, transform_indices = @transform_4, window_bounds = array<i64: 4, 9>}, {pipeline_mode = #tpu.pipeline_mode<synchronous>, transform_indices = @transform_5, window_bounds = array<i64: 4, 1>}, {pipeline_mode = #tpu.pipeline_mode<synchronous>, transform_indices = @transform_6, window_bounds = array<i64: 4, 1>}, {transform_indices = @transform_7, window_bounds = array<i64: 2, 8, 256>}]} {
    %c0 = arith.constant 0 : index
    %c0_0 = arith.constant 0 : index
    %c0_1 = arith.constant 0 : index
    %0 = vector.load %arg1[%c0, %c0_0, %c0_1] : memref<2x4x256xf32, #tpu.memory_space<vmem>>, vector<1x4x256xf32>
    %1 = vector.shape_cast %0 : vector<1x4x256xf32> to vector<4x256xf32>
    %c1 = arith.constant 1 : index
    %c0_2 = arith.constant 0 : index
    %c0_3 = arith.constant 0 : index
    %2 = vector.load %arg1[%c1, %c0_2, %c0_3] : memref<2x4x256xf32, #tpu.memory_space<vmem>>, vector<1x4x256xf32>
    %3 = vector.shape_cast %2 : vector<1x4x256xf32> to vector<4x256xf32>
    %4 = tpu.concatenate %1, %3 in 1 : vector<4x256xf32>, vector<4x256xf32> -> vector<4x512xf32>
    %c0_4 = arith.constant 0 : index
    %c0_5 = arith.constant 0 : index
    %5 = vector.load %arg2[%c0_4, %c0_5] : memref<4x4xf32, #tpu.memory_space<vmem>>, vector<4x4xf32>
    %cst = arith.constant dense<0.000000e+00> : vector<4x512xf32>
    %6 = tpu.matmul %5, %4, %cst {dimension_numbers = #tpu.dot_dimension_numbers<[1], [0], [0], [1], [0, 0, 1, 1], [], []>} : vector<4x4xf32>, vector<4x512xf32>, vector<4x512xf32> -> vector<4x512xf32>
    %c0_6 = arith.constant 0 : index
    %c0_7 = arith.constant 0 : index
    %7 = vector.load %arg3[%c0_6, %c0_7] : memref<4x1xf32, #tpu.memory_space<vmem>>, vector<4x1xf32>
    %8 = vector.broadcast %7 : vector<4x1xf32> to vector<4x512xf32>
    %9 = arith.mulf %6, %8 : vector<4x512xf32>
    %c0_8 = arith.constant 0 : index
    %c0_9 = arith.constant 0 : index
    %10 = vector.load %arg4[%c0_8, %c0_9] : memref<4x1xf32, #tpu.memory_space<vmem>>, vector<4x1xf32>
    %11 = vector.broadcast %10 : vector<4x1xf32> to vector<4x512xf32>
    %12 = arith.addf %9, %11 : vector<4x512xf32>
    %cst_10 = arith.constant 0.000000e+00 : f32
    %13 = vector.broadcast %cst_10 : f32 to vector<4x512xf32>
    %14 = arith.maximumf %12, %13 : vector<4x512xf32>
    %15 = tpu.iota {dimensions = array<i32: 1>} : vector<1x512xi32>
    %c256_i32 = arith.constant 256 : i32
    %c0_i32 = arith.constant 0 : i32
    %16 = arith.cmpi eq, %c256_i32, %c0_i32 : i32
    %c1_i32 = arith.constant 1 : i32
    %17 = arith.select %16, %c1_i32, %c256_i32 : i32
    %18 = vector.broadcast %17 : i32 to vector<1x512xi32>
    %19 = arith.remsi %15, %18 : vector<1x512xi32>
    %c0_i32_11 = arith.constant 0 : i32
    %20 = vector.broadcast %c0_i32_11 : i32 to vector<1x512xi32>
    %21 = arith.cmpi ne, %19, %20 : vector<1x512xi32>
    %c0_i32_12 = arith.constant 0 : i32
    %22 = vector.broadcast %c0_i32_12 : i32 to vector<1x512xi32>
    %23 = arith.cmpi slt, %19, %22 : vector<1x512xi32>
    %c0_i32_13 = arith.constant 0 : i32
    %24 = arith.cmpi slt, %17, %c0_i32_13 : i32
    %25 = vector.broadcast %24 : i1 to vector<1x512xi1>
    %26 = vector.broadcast %25 : vector<1x512xi1> to vector<1x512xi1>
    %27 = arith.xori %23, %26 : vector<1x512xi1>
    %28 = arith.andi %27, %21 : vector<1x512xi1>
    %29 = vector.broadcast %17 : i32 to vector<1x512xi32>
    %30 = arith.addi %19, %29 : vector<1x512xi32>
    %31 = arith.select %28, %30, %19 : vector<1x512xi1>, vector<1x512xi32>
    %c16_i32 = arith.constant 16 : i32
    %c0_i32_14 = arith.constant 0 : i32
    %32 = arith.cmpi eq, %c16_i32, %c0_i32_14 : i32
    %c1_i32_15 = arith.constant 1 : i32
    %33 = arith.select %32, %c1_i32_15, %c16_i32 : i32
    %34 = vector.broadcast %33 : i32 to vector<1x512xi32>
    %35 = arith.remsi %31, %34 : vector<1x512xi32>
    %c0_i32_16 = arith.constant 0 : i32
    %36 = vector.broadcast %c0_i32_16 : i32 to vector<1x512xi32>
    %37 = arith.cmpi ne, %35, %36 : vector<1x512xi32>
    %c0_i32_17 = arith.constant 0 : i32
    %38 = vector.broadcast %c0_i32_17 : i32 to vector<1x512xi32>
    %39 = arith.cmpi slt, %35, %38 : vector<1x512xi32>
    %c0_i32_18 = arith.constant 0 : i32
    %40 = arith.cmpi slt, %33, %c0_i32_18 : i32
    %41 = vector.broadcast %40 : i1 to vector<1x512xi1>
    %42 = vector.broadcast %41 : vector<1x512xi1> to vector<1x512xi1>
    %43 = arith.xori %39, %42 : vector<1x512xi1>
    %44 = arith.andi %43, %37 : vector<1x512xi1>
    %45 = vector.broadcast %33 : i32 to vector<1x512xi32>
    %46 = arith.addi %35, %45 : vector<1x512xi32>
    %47 = arith.select %44, %46, %35 : vector<1x512xi1>, vector<1x512xi32>
    %c16_i32_19 = arith.constant 16 : i32
    %48 = vector.broadcast %c16_i32_19 : i32 to vector<1x512xi32>
    %49 = arith.cmpi sge, %31, %48 : vector<1x512xi32>
    %c240_i32 = arith.constant 240 : i32
    %50 = vector.broadcast %c240_i32 : i32 to vector<1x512xi32>
    %51 = arith.cmpi slt, %31, %50 : vector<1x512xi32>
    %c1_i32_20 = arith.constant 1 : i32
    %52 = vector.broadcast %c1_i32_20 : i32 to vector<1x512xi32>
    %53 = arith.cmpi sge, %47, %52 : vector<1x512xi32>
    %c14_i32 = arith.constant 14 : i32
    %54 = vector.broadcast %c14_i32 : i32 to vector<1x512xi32>
    %55 = arith.cmpi sle, %47, %54 : vector<1x512xi32>
    %c0_21 = arith.constant 0 : index
    %c0_22 = arith.constant 0 : index
    %56 = vector.load %arg5[%c0_21, %c0_22] : memref<4x9xf32, #tpu.memory_space<vmem>>, vector<4x9xf32>
    %cst_23 = arith.constant 0.000000e+00 : f32
    %57 = vector.broadcast %cst_23 : f32 to vector<4x512xf32>
    %c17_i32 = arith.constant 17 : i32
    %58 = tpu.dynamic_rotate %14 by %c17_i32 dim 1 : vector<4x512xf32>, i32 -> vector<4x512xf32>
    %59 = arith.andi %49, %53 : vector<1x512xi1>
    %cst_24 = arith.constant 0.000000e+00 : f32
    %60 = vector.shape_cast %59 : vector<1x512xi1> to vector<1x512xi1>
    %61 = vector.broadcast %60 : vector<1x512xi1> to vector<4x512xi1>
    %62 = vector.broadcast %cst_24 : f32 to vector<4x512xf32>
    %63 = arith.select %61, %58, %62 : vector<4x512xi1>, vector<4x512xf32>
    %64 = vector.extract_strided_slice %56 {offsets = [0, 0], sizes = [4, 1], strides = [1, 1]} : vector<4x9xf32> to vector<4x1xf32>
    %65 = vector.broadcast %64 : vector<4x1xf32> to vector<4x512xf32>
    %66 = arith.mulf %63, %65 : vector<4x512xf32>
    %67 = arith.addf %57, %66 : vector<4x512xf32>
    %c16_i32_25 = arith.constant 16 : i32
    %68 = tpu.dynamic_rotate %14 by %c16_i32_25 dim 1 : vector<4x512xf32>, i32 -> vector<4x512xf32>
    %cst_26 = arith.constant 0.000000e+00 : f32
    %69 = vector.shape_cast %49 : vector<1x512xi1> to vector<1x512xi1>
    %70 = vector.broadcast %69 : vector<1x512xi1> to vector<4x512xi1>
    %71 = vector.broadcast %cst_26 : f32 to vector<4x512xf32>
    %72 = arith.select %70, %68, %71 : vector<4x512xi1>, vector<4x512xf32>
    %73 = vector.extract_strided_slice %56 {offsets = [0, 1], sizes = [4, 1], strides = [1, 1]} : vector<4x9xf32> to vector<4x1xf32>
    %74 = vector.broadcast %73 : vector<4x1xf32> to vector<4x512xf32>
    %75 = arith.mulf %72, %74 : vector<4x512xf32>
    %76 = arith.addf %67, %75 : vector<4x512xf32>
    %c15_i32 = arith.constant 15 : i32
    %77 = tpu.dynamic_rotate %14 by %c15_i32 dim 1 : vector<4x512xf32>, i32 -> vector<4x512xf32>
    %78 = arith.andi %49, %55 : vector<1x512xi1>
    %cst_27 = arith.constant 0.000000e+00 : f32
    %79 = vector.shape_cast %78 : vector<1x512xi1> to vector<1x512xi1>
    %80 = vector.broadcast %79 : vector<1x512xi1> to vector<4x512xi1>
    %81 = vector.broadcast %cst_27 : f32 to vector<4x512xf32>
    %82 = arith.select %80, %77, %81 : vector<4x512xi1>, vector<4x512xf32>
    %83 = vector.extract_strided_slice %56 {offsets = [0, 2], sizes = [4, 1], strides = [1, 1]} : vector<4x9xf32> to vector<4x1xf32>
    %84 = vector.broadcast %83 : vector<4x1xf32> to vector<4x512xf32>
    %85 = arith.mulf %82, %84 : vector<4x512xf32>
    %86 = arith.addf %76, %85 : vector<4x512xf32>
    %c1_i32_28 = arith.constant 1 : i32
    %87 = tpu.dynamic_rotate %14 by %c1_i32_28 dim 1 : vector<4x512xf32>, i32 -> vector<4x512xf32>
    %cst_29 = arith.constant 0.000000e+00 : f32
    %88 = vector.shape_cast %53 : vector<1x512xi1> to vector<1x512xi1>
    %89 = vector.broadcast %88 : vector<1x512xi1> to vector<4x512xi1>
    %90 = vector.broadcast %cst_29 : f32 to vector<4x512xf32>
    %91 = arith.select %89, %87, %90 : vector<4x512xi1>, vector<4x512xf32>
    %92 = vector.extract_strided_slice %56 {offsets = [0, 3], sizes = [4, 1], strides = [1, 1]} : vector<4x9xf32> to vector<4x1xf32>
    %93 = vector.broadcast %92 : vector<4x1xf32> to vector<4x512xf32>
    %94 = arith.mulf %91, %93 : vector<4x512xf32>
    %95 = arith.addf %86, %94 : vector<4x512xf32>
    %96 = vector.extract_strided_slice %56 {offsets = [0, 4], sizes = [4, 1], strides = [1, 1]} : vector<4x9xf32> to vector<4x1xf32>
    %97 = vector.broadcast %96 : vector<4x1xf32> to vector<4x512xf32>
    %98 = arith.mulf %14, %97 : vector<4x512xf32>
    %99 = arith.addf %95, %98 : vector<4x512xf32>
    %c511_i32 = arith.constant 511 : i32
    %100 = tpu.dynamic_rotate %14 by %c511_i32 dim 1 : vector<4x512xf32>, i32 -> vector<4x512xf32>
    %cst_30 = arith.constant 0.000000e+00 : f32
    %101 = vector.shape_cast %55 : vector<1x512xi1> to vector<1x512xi1>
    %102 = vector.broadcast %101 : vector<1x512xi1> to vector<4x512xi1>
    %103 = vector.broadcast %cst_30 : f32 to vector<4x512xf32>
    %104 = arith.select %102, %100, %103 : vector<4x512xi1>, vector<4x512xf32>
    %105 = vector.extract_strided_slice %56 {offsets = [0, 5], sizes = [4, 1], strides = [1, 1]} : vector<4x9xf32> to vector<4x1xf32>
    %106 = vector.broadcast %105 : vector<4x1xf32> to vector<4x512xf32>
    %107 = arith.mulf %104, %106 : vector<4x512xf32>
    %108 = arith.addf %99, %107 : vector<4x512xf32>
    %c497_i32 = arith.constant 497 : i32
    %109 = tpu.dynamic_rotate %14 by %c497_i32 dim 1 : vector<4x512xf32>, i32 -> vector<4x512xf32>
    %110 = arith.andi %51, %53 : vector<1x512xi1>
    %cst_31 = arith.constant 0.000000e+00 : f32
    %111 = vector.shape_cast %110 : vector<1x512xi1> to vector<1x512xi1>
    %112 = vector.broadcast %111 : vector<1x512xi1> to vector<4x512xi1>
    %113 = vector.broadcast %cst_31 : f32 to vector<4x512xf32>
    %114 = arith.select %112, %109, %113 : vector<4x512xi1>, vector<4x512xf32>
    %115 = vector.extract_strided_slice %56 {offsets = [0, 6], sizes = [4, 1], strides = [1, 1]} : vector<4x9xf32> to vector<4x1xf32>
    %116 = vector.broadcast %115 : vector<4x1xf32> to vector<4x512xf32>
    %117 = arith.mulf %114, %116 : vector<4x512xf32>
    %118 = arith.addf %108, %117 : vector<4x512xf32>
    %c496_i32 = arith.constant 496 : i32
    %119 = tpu.dynamic_rotate %14 by %c496_i32 dim 1 : vector<4x512xf32>, i32 -> vector<4x512xf32>
    %cst_32 = arith.constant 0.000000e+00 : f32
    %120 = vector.shape_cast %51 : vector<1x512xi1> to vector<1x512xi1>
    %121 = vector.broadcast %120 : vector<1x512xi1> to vector<4x512xi1>
    %122 = vector.broadcast %cst_32 : f32 to vector<4x512xf32>
    %123 = arith.select %121, %119, %122 : vector<4x512xi1>, vector<4x512xf32>
    %124 = vector.extract_strided_slice %56 {offsets = [0, 7], sizes = [4, 1], strides = [1, 1]} : vector<4x9xf32> to vector<4x1xf32>
    %125 = vector.broadcast %124 : vector<4x1xf32> to vector<4x512xf32>
    %126 = arith.mulf %123, %125 : vector<4x512xf32>
    %127 = arith.addf %118, %126 : vector<4x512xf32>
    %c495_i32 = arith.constant 495 : i32
    %128 = tpu.dynamic_rotate %14 by %c495_i32 dim 1 : vector<4x512xf32>, i32 -> vector<4x512xf32>
    %129 = arith.andi %51, %55 : vector<1x512xi1>
    %cst_33 = arith.constant 0.000000e+00 : f32
    %130 = vector.shape_cast %129 : vector<1x512xi1> to vector<1x512xi1>
    %131 = vector.broadcast %130 : vector<1x512xi1> to vector<4x512xi1>
    %132 = vector.broadcast %cst_33 : f32 to vector<4x512xf32>
    %133 = arith.select %131, %128, %132 : vector<4x512xi1>, vector<4x512xf32>
    %134 = vector.extract_strided_slice %56 {offsets = [0, 8], sizes = [4, 1], strides = [1, 1]} : vector<4x9xf32> to vector<4x1xf32>
    %135 = vector.broadcast %134 : vector<4x1xf32> to vector<4x512xf32>
    %136 = arith.mulf %133, %135 : vector<4x512xf32>
    %137 = arith.addf %127, %136 : vector<4x512xf32>
    %c0_34 = arith.constant 0 : index
    %c0_35 = arith.constant 0 : index
    %138 = vector.load %arg6[%c0_34, %c0_35] : memref<4x1xf32, #tpu.memory_space<vmem>>, vector<4x1xf32>
    %139 = vector.broadcast %138 : vector<4x1xf32> to vector<4x512xf32>
    %140 = arith.mulf %137, %139 : vector<4x512xf32>
    %c0_36 = arith.constant 0 : index
    %c0_37 = arith.constant 0 : index
    %141 = vector.load %arg7[%c0_36, %c0_37] : memref<4x1xf32, #tpu.memory_space<vmem>>, vector<4x1xf32>
    %142 = vector.broadcast %141 : vector<4x1xf32> to vector<4x512xf32>
    %143 = arith.addf %140, %142 : vector<4x512xf32>
    %cst_38 = arith.constant 0.000000e+00 : f32
    %144 = vector.broadcast %cst_38 : f32 to vector<4x512xf32>
    %145 = arith.maximumf %143, %144 : vector<4x512xf32>
    %146 = tpu.concatenate %14, %145 in 0 : vector<4x512xf32>, vector<4x512xf32> -> vector<8x512xf32>
    %147 = vector.extract_strided_slice %146 {offsets = [0, 0], sizes = [8, 256], strides = [1, 1]} : vector<8x512xf32> to vector<8x256xf32>
    %c0_39 = arith.constant 0 : index
    %c0_40 = arith.constant 0 : index
    %c0_41 = arith.constant 0 : index
    %148 = vector.load %arg8[%c0_39, %c0_40, %c0_41] : memref<2x8x256xf32, #tpu.memory_space<vmem>>, vector<1x8x256xf32>
    %149 = vector.shape_cast %148 : vector<1x8x256xf32> to vector<8x256xf32>
    %150 = vector.shape_cast %147 : vector<8x256xf32> to vector<1x8x256xf32>
    tpu.vector_store %arg8[%c0_39, %c0_40, %c0_41], %150 {strides = array<i32>} : memref<2x8x256xf32, #tpu.memory_space<vmem>>, vector<1x8x256xf32>,
    %151 = vector.extract_strided_slice %146 {offsets = [0, 256], sizes = [8, 256], strides = [1, 1]} : vector<8x512xf32> to vector<8x256xf32>
    %c1_42 = arith.constant 1 : index
    %c0_43 = arith.constant 0 : index
    %c0_44 = arith.constant 0 : index
    %152 = vector.load %arg8[%c1_42, %c0_43, %c0_44] : memref<2x8x256xf32, #tpu.memory_space<vmem>>, vector<1x8x256xf32>
    %153 = vector.shape_cast %152 : vector<1x8x256xf32> to vector<8x256xf32>
    %154 = vector.shape_cast %151 : vector<8x256xf32> to vector<1x8x256xf32>
    tpu.vector_store %arg8[%c1_42, %c0_43, %c0_44], %154 {strides = array<i32>} : memref<2x8x256xf32, #tpu.memory_space<vmem>>, vector<1x8x256xf32>,
    return
  }
  func.func @transform_0(%arg0: i32) -> (i32, i32, i32) {
    %c0_i32 = arith.constant 0 : i32
    %c0_i32_0 = arith.constant 0 : i32
    %c0_i32_1 = arith.constant 0 : i32
    return %arg0, %c0_i32, %c0_i32_0 : i32, i32, i32
  }
  func.func @transform_1(%arg0: i32) -> (i32, i32) {
    %c0_i32 = arith.constant 0 : i32
    %c0_i32_0 = arith.constant 0 : i32
    %c0_i32_1 = arith.constant 0 : i32
    return %c0_i32, %c0_i32_0 : i32, i32
  }
  func.func @transform_2(%arg0: i32) -> (i32, i32) {
    %c0_i32 = arith.constant 0 : i32
    %c0_i32_0 = arith.constant 0 : i32
    %c0_i32_1 = arith.constant 0 : i32
    return %c0_i32, %c0_i32_0 : i32, i32
  }
  func.func @transform_3(%arg0: i32) -> (i32, i32) {
    %c0_i32 = arith.constant 0 : i32
    %c0_i32_0 = arith.constant 0 : i32
    %c0_i32_1 = arith.constant 0 : i32
    return %c0_i32, %c0_i32_0 : i32, i32
  }
  func.func @transform_4(%arg0: i32) -> (i32, i32) {
    %c0_i32 = arith.constant 0 : i32
    %c0_i32_0 = arith.constant 0 : i32
    %c0_i32_1 = arith.constant 0 : i32
    return %c0_i32, %c0_i32_0 : i32, i32
  }
  func.func @transform_5(%arg0: i32) -> (i32, i32) {
    %c0_i32 = arith.constant 0 : i32
    %c0_i32_0 = arith.constant 0 : i32
    %c0_i32_1 = arith.constant 0 : i32
    return %c0_i32, %c0_i32_0 : i32, i32
  }
  func.func @transform_6(%arg0: i32) -> (i32, i32) {
    %c0_i32 = arith.constant 0 : i32
    %c0_i32_0 = arith.constant 0 : i32
    %c0_i32_1 = arith.constant 0 : i32
    return %c0_i32, %c0_i32_0 : i32, i32
  }
  func.func @transform_7(%arg0: i32) -> (i32, i32, i32) {
    %c0_i32 = arith.constant 0 : i32
    %c0_i32_0 = arith.constant 0 : i32
    %c0_i32_1 = arith.constant 0 : i32
    return %arg0, %c0_i32, %c0_i32_0 : i32, i32, i32
  }
}

</mosaic_0001>

<llo_original>
// kernel: ghost_module_forward.1
$region0: #{ghost_module_forward.1}
  #allocation0 [shape = 'u32[]', space=smem, size = 0x4, offset = 0x4, fixed_abs, tag = 'smem constant byte address 0x4 - core index']
  #allocation1 [shape = 'u32[144,128]{1,0:T(1,128)}', space=vmem, size = 0x12000, scoped, tag = 'internal scratch']
  %s0 = inlined_call_operand.vmem [shape: f32[4,4,256], index: 0, kind: input, shape index: {}]
  %s1 = inlined_call_operand.vmem [shape: f32[4,4], index: 1, kind: input, shape index: {}]
  %s2 = inlined_call_operand.vmem [shape: f32[4,1], index: 2, kind: input, shape index: {}]
  %s3 = inlined_call_operand.vmem [shape: f32[4,1], index: 3, kind: input, shape index: {}]
  %s4 = inlined_call_operand.vmem [shape: f32[4,9], index: 4, kind: input, shape index: {}]
  %s5 = inlined_call_operand.vmem [shape: f32[4,1], index: 5, kind: input, shape index: {}]
  %s6 = inlined_call_operand.vmem [shape: f32[4,1], index: 6, kind: input, shape index: {}]
  %s7 = inlined_call_operand.vmem [shape: f32[4,8,256], index: 7, kind: output, shape index: {}]
  %s8 = sld [smem:[#allocation0]]
  $region61: #{ghost_module_forward.1} parent=0
    _
  %s10 = ssub.s32 1, %s8
  %s11 = scalar_select 0, %s10, %s8
  loop: start=0, step=1, limit=4
  $region2: #{ghost_module_forward.1} parent=0 // loop_pre_header
    _
  $region3: #{ghost_module_forward.1} parent=0 // loop_header
    %s13 = sphi 0, %s17
    %p14 = scmp.ge.s32.totalorder %s13, 4
    %s23 = sphi 0, %s25
    %s26 = sphi 0, %s23
    %s27 = sphi 0, %s26
    %s43 = sphi 0, %s27
    %s47 = sphi 0, %s47
    %s49 = sphi 0, %s47
    %s50 = sphi 0, %s49
    %s64 = sphi 0, %s50
    %s68 = sphi 0, %s68
    %s70 = sphi 0, %s68
    %s71 = sphi 0, %s70
    %s85 = sphi 0, %s71
    %s89 = sphi 0, %s89
    %s91 = sphi 0, %s89
    %s92 = sphi 0, %s91
    %s106 = sphi 0, %s92
    %s110 = sphi 0, %s110
    %s112 = sphi 0, %s110
    %s113 = sphi 0, %s112
    %s127 = sphi 0, %s113
    %s131 = sphi 0, %s131
    %s133 = sphi 0, %s131
    %s134 = sphi 0, %s133
    %s148 = sphi 0, %s134
    %s152 = sphi 0, %s152
    %s154 = sphi 0, %s152
    %s155 = sphi 0, %s154
    %s169 = sphi 0, %s155
    %s175 = sphi 0, %s177
    %s178 = sphi 0, %s175
    %s179 = sphi 0, %s178
    %s195 = sphi 0, %s179
  $region4: #{ghost_module_forward.1} parent=0 // loop_header_branch
    %16 = sbr.rel (%p14) target = $region8
  $region5: #{ghost_module_forward.1} parent=0 // loop_body
    %s18 = ssub.s32 %s13, 1
    %s19 = ssub.s32 %s13, 2
    %s20 = sadd.s32 %s13, 1
    %s21 = ssub.s32 %s13, %s20
    %p22 = scmp.eq.s32.totalorder %s21, 0
    %s24 = sadd.s32 %s23, 1
    %s25 = scalar_select %p22, %s23, %s24
    %p28 = pneg %p22
    %p29 = scmp.eq.s32.totalorder %s13, 1
    %p30 = por %p28, %p29
    %p31 = scmp.ne.s32.totalorder %s23, %s26
    %p32 = scmp.eq.s32.totalorder %s13, 0
    %p33 = por %p31, %p32
    %p34 = scmp.ne.s32.totalorder %s23, %s26
    %p35 = scmp.eq.s32.totalorder %s18, 1
    %p36 = por %p34, %p35
    %p37 = scmp.ne.s32.totalorder %s26, %s27
    %p38 = scmp.eq.s32.totalorder %s18, 0
    %p39 = por %p37, %p38
    %p40 = scmp.ne.s32.totalorder %s26, %s27
    %p41 = scmp.eq.s32.totalorder %s19, 1
    %p42 = por %p40, %p41
    %p44 = scmp.ne.s32.totalorder %s27, %s43
    %p45 = scmp.eq.s32.totalorder %s19, 0
    %p46 = por %p44, %p45
    %s48 = sadd.s32 %s47, 1
    %p51 = scmp.eq.s32.totalorder %s13, 1
    %p52 = scmp.ne.s32.totalorder %s47, %s49
    %p53 = scmp.eq.s32.totalorder %s13, 0
    %p54 = por %p52, %p53
    %p55 = scmp.ne.s32.totalorder %s47, %s49
    %p56 = scmp.eq.s32.totalorder %s18, 1
    %p57 = por %p55, %p56
    %p58 = scmp.ne.s32.totalorder %s49, %s50
    %p59 = scmp.eq.s32.totalorder %s18, 0
    %p60 = por %p58, %p59
    %p61 = scmp.ne.s32.totalorder %s49, %s50
    %p62 = scmp.eq.s32.totalorder %s19, 1
    %p63 = por %p61, %p62
    %p65 = scmp.ne.s32.totalorder %s50, %s64
    %p66 = scmp.eq.s32.totalorder %s19, 0
    %p67 = por %p65, %p66
    %s69 = sadd.s32 %s68, 1
    %p72 = scmp.eq.s32.totalorder %s13, 1
    %p73 = scmp.ne.s32.totalorder %s68, %s70
    %p74 = scmp.eq.s32.totalorder %s13, 0
    %p75 = por %p73, %p74
    %p76 = scmp.ne.s32.totalorder %s68, %s70
    %p77 = scmp.eq.s32.totalorder %s18, 1
    %p78 = por %p76, %p77
    %p79 = scmp.ne.s32.totalorder %s70, %s71
    %p80 = scmp.eq.s32.totalorder %s18, 0
    %p81 = por %p79, %p80
    %p82 = scmp.ne.s32.totalorder %s70, %s71
    %p83 = scmp.eq.s32.totalorder %s19, 1
    %p84 = por %p82, %p83
    %p86 = scmp.ne.s32.totalorder %s71, %s85
    %p87 = scmp.eq.s32.totalorder %s19, 0
    %p88 = por %p86, %p87
    %s90 = sadd.s32 %s89, 1
    %p93 = scmp.eq.s32.totalorder %s13, 1
    %p94 = scmp.ne.s32.totalorder %s89, %s91
    %p95 = scmp.eq.s32.totalorder %s13, 0
    %p96 = por %p94, %p95
    %p97 = scmp.ne.s32.totalorder %s89, %s91
    %p98 = scmp.eq.s32.totalorder %s18, 1
    %p99 = por %p97, %p98
    %p100 = scmp.ne.s32.totalorder %s91, %s92
    %p101 = scmp.eq.s32.totalorder %s18, 0
    %p102 = por %p100, %p101
    %p103 = scmp.ne.s32.totalorder %s91, %s92
    %p104 = scmp.eq.s32.totalorder %s19, 1
    %p105 = por %p103, %p104
    %p107 = scmp.ne.s32.totalorder %s92, %s106
    %p108 = scmp.eq.s32.totalorder %s19, 0
    %p109 = por %p107, %p108
    %s111 = sadd.s32 %s110, 1
    %p114 = scmp.eq.s32.totalorder %s13, 1
    %p115 = scmp.ne.s32.totalorder %s110, %s112
    %p116 = scmp.eq.s32.totalorder %s13, 0
    %p117 = por %p115, %p116
    %p118 = scmp.ne.s32.totalorder %s110, %s112
    %p119 = scmp.eq.s32.totalorder %s18, 1
    %p120 = por %p118, %p119
    %p121 = scmp.ne.s32.totalorder %s112, %s113
    %p122 = scmp.eq.s32.totalorder %s18, 0
    %p123 = por %p121, %p122
    %p124 = scmp.ne.s32.totalorder %s112, %s113
    %p125 = scmp.eq.s32.totalorder %s19, 1
    %p126 = por %p124, %p125
    %p128 = scmp.ne.s32.totalorder %s113, %s127
    %p129 = scmp.eq.s32.totalorder %s19, 0
    %p130 = por %p128, %p129
    %s132 = sadd.s32 %s131, 1
    %p135 = scmp.eq.s32.totalorder %s13, 1
    %p136 = scmp.ne.s32.totalorder %s131, %s133
    %p137 = scmp.eq.s32.totalorder %s13, 0
    %p138 = por %p136, %p137
    %p139 = scmp.ne.s32.totalorder %s131, %s133
    %p140 = scmp.eq.s32.totalorder %s18, 1
    %p141 = por %p139, %p140
    %p142 = scmp.ne.s32.totalorder %s133, %s134
    %p143 = scmp.eq.s32.totalorder %s18, 0
    %p144 = por %p142, %p143
    %p145 = scmp.ne.s32.totalorder %s133, %s134
    %p146 = scmp.eq.s32.totalorder %s19, 1
    %p147 = por %p145, %p146
    %p149 = scmp.ne.s32.totalorder %s134, %s148
    %p150 = scmp.eq.s32.totalorder %s19, 0
    %p151 = por %p149, %p150
    %s153 = sadd.s32 %s152, 1
    %p156 = scmp.eq.s32.totalorder %s13, 1
    %p157 = scmp.ne.s32.totalorder %s152, %s154
    %p158 = scmp.eq.s32.totalorder %s13, 0
    %p159 = por %p157, %p158
    %p160 = scmp.ne.s32.totalorder %s152, %s154
    %p161 = scmp.eq.s32.totalorder %s18, 1
    %p162 = por %p160, %p161
    %p163 = scmp.ne.s32.totalorder %s154, %s155
    %p164 = scmp.eq.s32.totalorder %s18, 0
    %p165 = por %p163, %p164
    %p166 = scmp.ne.s32.totalorder %s154, %s155
    %p167 = scmp.eq.s32.totalorder %s19, 1
    %p168 = por %p166, %p167
    %p170 = scmp.ne.s32.totalorder %s155, %s169
    %p171 = scmp.eq.s32.totalorder %s19, 0
    %p172 = por %p170, %p171
    %s173 = ssub.s32 %s13, %s20
    %p174 = scmp.eq.s32.totalorder %s173, 0
    %s176 = sadd.s32 %s175, 1
    %s177 = scalar_select %p174, %s175, %s176
    %p180 = pneg %p174
    %p181 = scmp.eq.s32.totalorder %s13, 1
    %p182 = por %p180, %p181
    %p183 = scmp.ne.s32.totalorder %s175, %s178
    %p184 = scmp.eq.s32.totalorder %s13, 0
    %p185 = por %p183, %p184
    %p186 = scmp.ne.s32.totalorder %s175, %s178
    %p187 = scmp.eq.s32.totalorder %s18, 1
    %p188 = por %p186, %p187
    %p189 = scmp.ne.s32.totalorder %s178, %s179
    %p190 = scmp.eq.s32.totalorder %s18, 0
    %p191 = por %p189, %p190
    %p192 = scmp.ne.s32.totalorder %s178, %s179
    %p193 = scmp.eq.s32.totalorder %s19, 1
    %p194 = por %p192, %p193
    %p196 = scmp.ne.s32.totalorder %s179, %s195
    %p197 = scmp.eq.s32.totalorder %s19, 0
    %p198 = por %p196, %p197
    %p199 = scmp.le.s32.totalorder 1, %s13
    %p200 = scmp.lt.s32.totalorder %s13, 3
    %p201 = pnand %p199, %p200
    %p202 = pneg %p201
    // Predicated region
    $region9: #{ghost_module_forward.1} parent=5 // pred_check
      _
    $region10: #{ghost_module_forward.1} parent=5 // pred_check_branch
      %204 = sbr.rel (%p201) target = $region12
    $region11: #{ghost_module_forward.1} parent=5 // pred_region
      %s205 = ssub.s32 %s13, 1
      // Predicated region
      $region13: #{ghost_module_forward.1} parent=11 // pred_check
        %p206 = pneg %p60
      $region14: #{ghost_module_forward.1} parent=11 // pred_check_branch
        %208 = sbr.rel (%p206) target = $region16
      $region15: #{ghost_module_forward.1} parent=11 // pred_region
        _
      $region16: #{ghost_module_forward.1} parent=11 // pred_fallthru
        _
      // Predicated region
      $region17: #{ghost_module_forward.1} parent=11 // pred_check
        %p209 = pneg %p81
      $region18: #{ghost_module_forward.1} parent=11 // pred_check_branch
        %211 = sbr.rel (%p209) target = $region20
      $region19: #{ghost_module_forward.1} parent=11 // pred_region
        _
      $region20: #{ghost_module_forward.1} parent=11 // pred_fallthru
        _
      // Predicated region
      $region21: #{ghost_module_forward.1} parent=11 // pred_check
        %p212 = pneg %p102
      $region22: #{ghost_module_forward.1} parent=11 // pred_check_branch
        %214 = sbr.rel (%p212) target = $region24
      $region23: #{ghost_module_forward.1} parent=11 // pred_region
        _
      $region24: #{ghost_module_forward.1} parent=11 // pred_fallthru
        _
      // Predicated region
      $region25: #{ghost_module_forward.1} parent=11 // pred_check
        %p215 = pneg %p123
      $region26: #{ghost_module_forward.1} parent=11 // pred_check_branch
        %217 = sbr.rel (%p215) target = $region28
      $region27: #{ghost_module_forward.1} parent=11 // pred_region
        _
      $region28: #{ghost_module_forward.1} parent=11 // pred_fallthru
        _
      // Predicated region
      $region29: #{ghost_module_forward.1} parent=11 // pred_check
        %p218 = pneg %p144
      $region30: #{ghost_module_forward.1} parent=11 // pred_check_branch
        %220 = sbr.rel (%p218) target = $region32
      $region31: #{ghost_module_forward.1} parent=11 // pred_region
        _
      $region32: #{ghost_module_forward.1} parent=11 // pred_fallthru
        _
      // Predicated region
      $region33: #{ghost_module_forward.1} parent=11 // pred_check
        %p221 = pneg %p165
      $region34: #{ghost_module_forward.1} parent=11 // pred_check_branch
        %223 = sbr.rel (%p221) target = $region36
      $region35: #{ghost_module_forward.1} parent=11 // pred_region
        _
      $region36: #{ghost_module_forward.1} parent=11 // pred_fallthru
        _
    $region12: #{ghost_module_forward.1} parent=5 // pred_fallthru
      _
    %p224 = scmp.lt.s32.totalorder %s13, 2
    // Predicated region
    $region37: #{ghost_module_forward.1} parent=5 // pred_check
      %p225 = pneg %p224
    $region38: #{ghost_module_forward.1} parent=5 // pred_check_branch
      %227 = sbr.rel (%p225) target = $region40
    $region39: #{ghost_module_forward.1} parent=5 // pred_region
      // Predicated region
      $region41: #{ghost_module_forward.1} parent=39 // pred_check
        %p228 = pneg %p33
      $region42: #{ghost_module_forward.1} parent=39 // pred_check_branch
        %230 = sbr.rel (%p228) target = $region44
      $region43: #{ghost_module_forward.1} parent=39 // pred_region
        %s231 = smul.u32 2, %s13
        %p232 = scmp.lt.s32.totalorder %s231, 3
        %s233 = scalar_select %p232, %s231, 3
        %s234 = smul.addr %s233, 2
        %s235 = smul.addr %s234, 4
        %s236 = scalar_lea.vmem %s0, %s235
        %s237 = smul.u32 2, %s13
      $region44: #{ghost_module_forward.1} parent=39 // pred_fallthru
        _
    $region40: #{ghost_module_forward.1} parent=5 // pred_fallthru
      _
    %p238 = scmp.le.s32.totalorder 1, %s13
    %p239 = scmp.lt.s32.totalorder %s13, 3
    %p240 = pnand %p238, %p239
    %p241 = pneg %p240
    // Predicated region
    $region45: #{ghost_module_forward.1} parent=5 // pred_check
      _
    $region46: #{ghost_module_forward.1} parent=5 // pred_check_branch
      %243 = sbr.rel (%p240) target = $region48
    $region47: #{ghost_module_forward.1} parent=5 // pred_region
      %s244 = ssub.s32 %s13, 1
      %s245 = smul.u32 2, %s18
      %p246 = scmp.lt.s32.totalorder %s245, 3
      %s247 = scalar_select %p246, %s245, 3
      %s248 = smul.addr %s247, 2
      %s249 = smul.addr %s248, 4
      %s250 = scalar_lea.vmem %s0, %s249
      %p251 = pneg %p39
      %p252 = pneg %p36
      %p253 = pneg %p60
      %p254 = pneg %p57
      %p255 = pneg %p81
      %p256 = pneg %p78
      %p257 = pneg %p102
      %p258 = pneg %p99
      %p259 = pneg %p123
      %p260 = pneg %p120
      %p261 = pneg %p144
      %p262 = pneg %p141
      %p263 = pneg %p165
      %p264 = pneg %p162
      %p265 = pneg %p191
      %p266 = pneg %p188
      %s267 = smul.u32 2, %s18
      %p268 = scmp.lt.s32.totalorder %s267, 3
      %s269 = scalar_select %p268, %s267, 3
      %s270 = smul.addr %s269, 2
      %s271 = smul.addr %s270, 8
      %s272 = scalar_lea.vmem %s7, %s271
      %s273 = smul.u32 2, %s18
      %p274 = scmp.lt.s32.totalorder %s273, 3
      %s275 = scalar_select %p274, %s273, 3
      %s276 = smul.addr %s275, 2
      %s277 = smul.addr %s276, 4
      %s278 = scalar_lea.vmem %s0, %s277
      %s279 = smul.u32 2, %s18
      %s280 = smul.u32 2, %s18
      %p281 = scmp.lt.s32.totalorder %s280, 3
      %s282 = scalar_select %p281, %s280, 3
      %s283 = smul.addr %s282, 2
      %s284 = smul.addr %s283, 8
      %s285 = scalar_lea.vmem %s7, %s284
      %s286 = smul.u32 2, %s18
      %v287 = vld [vmem:[%s278] sm:$0xff]
      %s288 = scalar_lea.vmem %s278, 8
      %v289 = vld [vmem:[%s288] sm:$0xff]
      %v291 = vcombine.high %v287, %v287
      %v293 = vcombine.high %v289, %v289
      %v294 = vld [vmem:[%s1] sm:$0xf]
      %vm295 = vcmask 31744
      %v297 = vsel %vm295, %v294, 0
      %vm299 = vcmask 1043456
      %v300 = vsel %vm299, %v287, 0
      %v302 = vsel %vm299, %v291, 0
      %v304 = vsel %vm299, %v289, 0
      %v306 = vsel %vm299, %v293, 0
      %308 = vmatprep.subr.mxu0 %v302
      %309 = vmatpush1.msra.mxu0 %v300
      %310 = vmatprep.subr.mxu0 0.0
      %311 = vmatpush1.msra.mxu0 0.0
      %312 = vmatprep.subr.mxu0 0.0
      %313 = vmatpush1.msra.mxu0 0.0
      %314 = vmatprep.subr.mxu0 0.0
      %315 = vmatpush1.msra.mxu0 0.0
      %316 = vmatprep.subr.mxu0 0.0
      %317 = vmatpush1.msra.mxu0 0.0
      %318 = vmatprep.subr.mxu0 0.0
      %319 = vmatpush1.msra.mxu0 0.0
      %320 = vmatprep.subr.mxu0 0.0
      %321 = vmatpush1.msra.mxu0 0.0
      %322 = vmatprep.subr.mxu0 0.0
      %323 = vmatpush1.msra.mxu0 0.0
      %324 = vmatprep.subr.mxu0 0.0
      %325 = vmatpush1.msra.mxu0 0.0
      %326 = vmatprep.subr.mxu0 0.0
      %327 = vmatpush1.msra.mxu0 0.0
      %328 = vmatprep.subr.mxu0 0.0
      %329 = vmatpush1.msra.mxu0 0.0
      %330 = vmatprep.subr.mxu0 0.0
      %331 = vmatpush1.msra.mxu0 0.0
      %332 = vmatprep.subr.mxu0 0.0
      %333 = vmatpush1.msra.mxu0 0.0
      %334 = vmatprep.subr.mxu0 0.0
      %335 = vmatpush1.msra.mxu0 0.0
      %336 = vmatprep.subr.mxu0 0.0
      %337 = vmatpush1.msra.mxu0 0.0
      %338 = vmatprep.subr.mxu0 0.0
      %339 = vmatpush1.msra.mxu0 0.0
      %340 = vmatprep.subr.mxu0 0.0
      %341 = vmatpush1.msra.mxu0 0.0
      %342 = vmatprep.subr.mxu0 0.0
      %343 = vmatpush1.msra.mxu0 0.0
      %344 = vmatprep.subr.mxu0 0.0
      %345 = vmatpush1.msra.mxu0 0.0
      %346 = vmatprep.subr.mxu0 0.0
      %347 = vmatpush1.msra.mxu0 0.0
      %348 = vmatprep.subr.mxu0 0.0
      %349 = vmatpush1.msra.mxu0 0.0
      %350 = vmatprep.subr.mxu0 0.0
      %351 = vmatpush1.msra.mxu0 0.0
      %352 = vmatprep.subr.mxu0 0.0
      %353 = vmatpush1.msra.mxu0 0.0
      %354 = vmatprep.subr.mxu0 0.0
      %355 = vmatpush1.msra.mxu0 0.0
      %356 = vmatprep.subr.mxu0 0.0
      %357 = vmatpush1.msra.mxu0 0.0
      %358 = vmatprep.subr.mxu0 0.0
      %359 = vmatpush1.msra.mxu0 0.0
      %360 = vmatprep.subr.mxu0 0.0
      %361 = vmatpush1.msra.mxu0 0.0
      %362 = vmatprep.subr.mxu0 0.0
      %363 = vmatpush1.msra.mxu0 0.0
      %364 = vmatprep.subr.mxu0 0.0
      %365 = vmatpush1.msra.mxu0 0.0
      %366 = vmatprep.subr.mxu0 0.0
      %367 = vmatpush1.msra.mxu0 0.0
      %368 = vmatprep.subr.mxu0 0.0
      %369 = vmatpush1.msra.mxu0 0.0
      %370 = vmatprep.subr.mxu0 0.0
      %371 = vmatpush1.msra.mxu0 0.0
      %372 = vmatprep.mubr.f32.mxu0 0.0
      %373 = vmatmul.mubr.f32.gmra.mrb[0].mxu0 %v297
      %v374 = vpop.f32.mrb[0].mxu0
      %v375 = vadd.f32 0.0, %v374
      %v376 = vpop.f32.mrb[0].mxu0
      %v377 = vadd.f32 0.0, %v376
      %378 = vdwg.mxu0
      %379 = vmatprep.subr.mxu0 %v306
      %380 = vmatpush1.msra.mxu0 %v304
      %381 = vmatprep.subr.mxu0 0.0
      %382 = vmatpush1.msra.mxu0 0.0
      %383 = vmatprep.subr.mxu0 0.0
      %384 = vmatpush1.msra.mxu0 0.0
      %385 = vmatprep.subr.mxu0 0.0
      %386 = vmatpush1.msra.mxu0 0.0
      %387 = vmatprep.subr.mxu0 0.0
      %388 = vmatpush1.msra.mxu0 0.0
      %389 = vmatprep.subr.mxu0 0.0
      %390 = vmatpush1.msra.mxu0 0.0
      %391 = vmatprep.subr.mxu0 0.0
      %392 = vmatpush1.msra.mxu0 0.0
      %393 = vmatprep.subr.mxu0 0.0
      %394 = vmatpush1.msra.mxu0 0.0
      %395 = vmatprep.subr.mxu0 0.0
      %396 = vmatpush1.msra.mxu0 0.0
      %397 = vmatprep.subr.mxu0 0.0
      %398 = vmatpush1.msra.mxu0 0.0
      %399 = vmatprep.subr.mxu0 0.0
      %400 = vmatpush1.msra.mxu0 0.0
      %401 = vmatprep.subr.mxu0 0.0
      %402 = vmatpush1.msra.mxu0 0.0
      %403 = vmatprep.subr.mxu0 0.0
      %404 = vmatpush1.msra.mxu0 0.0
      %405 = vmatprep.subr.mxu0 0.0
      %406 = vmatpush1.msra.mxu0 0.0
      %407 = vmatprep.subr.mxu0 0.0
      %408 = vmatpush1.msra.mxu0 0.0
      %409 = vmatprep.subr.mxu0 0.0
      %410 = vmatpush1.msra.mxu0 0.0
      %411 = vmatprep.subr.mxu0 0.0
      %412 = vmatpush1.msra.mxu0 0.0
      %413 = vmatprep.subr.mxu0 0.0
      %414 = vmatpush1.msra.mxu0 0.0
      %415 = vmatprep.subr.mxu0 0.0
      %416 = vmatpush1.msra.mxu0 0.0
      %417 = vmatprep.subr.mxu0 0.0
      %418 = vmatpush1.msra.mxu0 0.0
      %419 = vmatprep.subr.mxu0 0.0
      %420 = vmatpush1.msra.mxu0 0.0
      %421 = vmatprep.subr.mxu0 0.0
      %422 = vmatpush1.msra.mxu0 0.0
      %423 = vmatprep.subr.mxu0 0.0
      %424 = vmatpush1.msra.mxu0 0.0
      %425 = vmatprep.subr.mxu0 0.0
      %426 = vmatpush1.msra.mxu0 0.0
      %427 = vmatprep.subr.mxu0 0.0
      %428 = vmatpush1.msra.mxu0 0.0
      %429 = vmatprep.subr.mxu0 0.0
      %430 = vmatpush1.msra.mxu0 0.0
      %431 = vmatprep.subr.mxu0 0.0
      %432 = vmatpush1.msra.mxu0 0.0
      %433 = vmatprep.subr.mxu0 0.0
      %434 = vmatpush1.msra.mxu0 0.0
      %435 = vmatprep.subr.mxu0 0.0
      %436 = vmatpush1.msra.mxu0 0.0
      %437 = vmatprep.subr.mxu0 0.0
      %438 = vmatpush1.msra.mxu0 0.0
      %439 = vmatprep.subr.mxu0 0.0
      %440 = vmatpush1.msra.mxu0 0.0
      %441 = vmatprep.subr.mxu0 0.0
      %442 = vmatpush1.msra.mxu0 0.0
      %443 = vmatprep.mubr.f32.mxu0 0.0
      %444 = vmatmul.mubr.f32.gmra.mrb[0].mxu0 %v297
      %v445 = vpop.f32.mrb[0].mxu0
      %v446 = vadd.f32 0.0, %v445
      %v447 = vpop.f32.mrb[0].mxu0
      %v448 = vadd.f32 0.0, %v447
      %449 = vdwg.mxu0
      %v450 = vld [vmem:[%s2] sm:$0xf]
      %452 = vset.pattern.permute.xlu0 0
      %453 = vperm.xlu0 %452, %v450
      %v454 = vpop.permute.xlu0 %453
      %v456 = vmul.f32 %v375, %v454
      %v457 = vmul.f32 %v377, %v454
      %v458 = vmul.f32 %v446, %v454
      %v459 = vmul.f32 %v448, %v454
      %v460 = vld [vmem:[%s3] sm:$0xf]
      %462 = vset.pattern.permute.xlu0 0
      %463 = vperm.xlu0 %462, %v460
      %v464 = vpop.permute.xlu0 %463
      %v466 = vadd.f32 %v456, %v464
      %v467 = vadd.f32 %v457, %v464
      %v468 = vadd.f32 %v458, %v464
      %v469 = vadd.f32 %v459, %v464
      %v470 = vmax.f32 %v466, 0.0
      %v471 = vmax.f32 %v467, 0.0
      %v472 = vmax.f32 %v468, 0.0
      %v473 = vmax.f32 %v469, 0.0
      %v474 = vlaneseq
      %v475 = vand.u32 %v474, 127
      %v476 = vadd.s32 %v475, 128
      %v477 = vadd.s32 %v475, 256
      %v478 = vadd.s32 %v475, 384
      %vm479 = vcmp.lt.s32.totalorder %v475, 0
      %v480 = vsub.s32 0, %v475
      %v481 = vsel %vm479, %v480, %v475
      %v482 = vshrl.u32 %v481, 8
      %v483 = vand.u32 %v481, 255
      %v484 = vsub.s32 0, %v483
      %v485 = vsel %vm479, %v484, %v483
      %vm486 = vcmp.lt.s32.totalorder %v476, 0
      %v487 = vsub.s32 0, %v476
      %v488 = vsel %vm486, %v487, %v476
      %v489 = vshrl.u32 %v488, 8
      %v490 = vand.u32 %v488, 255
      %v491 = vsub.s32 0, %v490
      %v492 = vsel %vm486, %v491, %v490
      %vm493 = vcmp.lt.s32.totalorder %v477, 0
      %v494 = vsub.s32 0, %v477
      %v495 = vsel %vm493, %v494, %v477
      %v496 = vshrl.u32 %v495, 8
      %v497 = vand.u32 %v495, 255
      %v498 = vsub.s32 0, %v497
      %v499 = vsel %vm493, %v498, %v497
      %vm500 = vcmp.lt.s32.totalorder %v478, 0
      %v501 = vsub.s32 0, %v478
      %v502 = vsel %vm500, %v501, %v478
      %v503 = vshrl.u32 %v502, 8
      %v504 = vand.u32 %v502, 255
      %v505 = vsub.s32 0, %v504
      %v506 = vsel %vm500, %v505, %v504
      %vm507 = vcmp.ne.s32.totalorder %v485, 0
      %vm508 = vcmp.ne.s32.totalorder %v492, 0
      %vm509 = vcmp.ne.s32.totalorder %v499, 0
      %vm510 = vcmp.ne.s32.totalorder %v506, 0
      %vm511 = vcmp.lt.s32.totalorder %v485, 0
      %vm512 = vcmp.lt.s32.totalorder %v492, 0
      %vm513 = vcmp.lt.s32.totalorder %v499, 0
      %vm514 = vcmp.lt.s32.totalorder %v506, 0
      %vm515 = vmand %vm511, %vm507
      %vm516 = vmand %vm512, %vm508
      %vm517 = vmand %vm513, %vm509
      %vm518 = vmand %vm514, %vm510
      %v519 = vadd.s32 %v485, 256
      %v520 = vadd.s32 %v492, 256
      %v521 = vadd.s32 %v499, 256
      %v522 = vadd.s32 %v506, 256
      %v523 = vsel %vm515, %v519, %v485
      %v524 = vsel %vm516, %v520, %v492
      %v525 = vsel %vm517, %v521, %v499
      %v526 = vsel %vm518, %v522, %v506
      %vm527 = vcmp.lt.s32.totalorder %v523, 0
      %v528 = vsub.s32 0, %v523
      %v529 = vsel %vm527, %v528, %v523
      %v530 = vshrl.u32 %v529, 4
      %v531 = vand.u32 %v529, 15
      %v532 = vsub.s32 0, %v531
      %v533 = vsel %vm527, %v532, %v531
      %vm534 = vcmp.lt.s32.totalorder %v524, 0
      %v535 = vsub.s32 0, %v524
      %v536 = vsel %vm534, %v535, %v524
      %v537 = vshrl.u32 %v536, 4
      %v538 = vand.u32 %v536, 15
      %v539 = vsub.s32 0, %v538
      %v540 = vsel %vm534, %v539, %v538
      %vm541 = vcmp.lt.s32.totalorder %v525, 0
      %v542 = vsub.s32 0, %v525
      %v543 = vsel %vm541, %v542, %v525
      %v544 = vshrl.u32 %v543, 4
      %v545 = vand.u32 %v543, 15
      %v546 = vsub.s32 0, %v545
      %v547 = vsel %vm541, %v546, %v545
      %vm548 = vcmp.lt.s32.totalorder %v526, 0
      %v549 = vsub.s32 0, %v526
      %v550 = vsel %vm548, %v549, %v526
      %v551 = vshrl.u32 %v550, 4
      %v552 = vand.u32 %v550, 15
      %v553 = vsub.s32 0, %v552
      %v554 = vsel %vm548, %v553, %v552
      %vm555 = vcmp.ne.s32.totalorder %v533, 0
      %vm556 = vcmp.ne.s32.totalorder %v540, 0
      %vm557 = vcmp.ne.s32.totalorder %v547, 0
      %vm558 = vcmp.ne.s32.totalorder %v554, 0
      %vm559 = vcmp.lt.s32.totalorder %v533, 0
      %vm560 = vcmp.lt.s32.totalorder %v540, 0
      %vm561 = vcmp.lt.s32.totalorder %v547, 0
      %vm562 = vcmp.lt.s32.totalorder %v554, 0
      %vm563 = vmand %vm559, %vm555
      %vm564 = vmand %vm560, %vm556
      %vm565 = vmand %vm561, %vm557
      %vm566 = vmand %vm562, %vm558
      %v567 = vadd.s32 %v533, 16
      %v568 = vadd.s32 %v540, 16
      %v569 = vadd.s32 %v547, 16
      %v570 = vadd.s32 %v554, 16
      %v571 = vsel %vm563, %v567, %v533
      %v572 = vsel %vm564, %v568, %v540
      %v573 = vsel %vm565, %v569, %v547
      %v574 = vsel %vm566, %v570, %v554
      %vm575 = vcmp.ge.s32.totalorder %v523, 16
      %vm576 = vcmp.ge.s32.totalorder %v524, 16
      %vm577 = vcmp.ge.s32.totalorder %v525, 16
      %vm578 = vcmp.ge.s32.totalorder %v526, 16
      %vm579 = vcmp.lt.s32.totalorder %v523, 240
      %vm580 = vcmp.lt.s32.totalorder %v524, 240
      %vm581 = vcmp.lt.s32.totalorder %v525, 240
      %vm582 = vcmp.lt.s32.totalorder %v526, 240
      %vm583 = vcmp.ge.s32.totalorder %v571, 1
      %vm584 = vcmp.ge.s32.totalorder %v572, 1
      %vm585 = vcmp.ge.s32.totalorder %v573, 1
      %vm586 = vcmp.ge.s32.totalorder %v574, 1
      %vm587 = vcmp.le.s32.totalorder %v571, 14
      %vm588 = vcmp.le.s32.totalorder %v572, 14
      %vm589 = vcmp.le.s32.totalorder %v573, 14
      %vm590 = vcmp.le.s32.totalorder %v574, 14
      %v591 = vld [vmem:[%s4] sm:$0xf]
      %592 = vrot.lane.b32.xlu0 %v470, 17
      %v593 = vpop.permute.xlu0 %592
      %594 = vrot.lane.b32.xlu0 %v471, 17
      %v595 = vpop.permute.xlu0 %594
      %596 = vrot.lane.b32.xlu0 %v472, 17
      %v597 = vpop.permute.xlu0 %596
      %598 = vrot.lane.b32.xlu0 %v473, 17
      %v599 = vpop.permute.xlu0 %598
      %vm600 = vcmp.lt.s32.totalorder %v475, 17
      %v601 = vsel %vm600, %v597, %v599
      %v602 = vsel %vm600, %v595, %v597
      %v603 = vsel %vm600, %v593, %v595
      %v604 = vsel %vm600, %v599, %v593
      %vm605 = vmand %vm575, %vm583
      %vm606 = vmand %vm576, %vm584
      %vm607 = vmand %vm577, %vm585
      %vm608 = vmand %vm578, %vm586
      %v609 = vsel %vm605, 1, 0
      %v610 = vsel %vm606, 1, 0
      %v611 = vsel %vm607, 1, 0
      %v612 = vsel %vm608, 1, 0
      %vm613 = vcmp.eq.s32.totalorder %v609, 1
      %vm614 = vcmp.eq.s32.totalorder %v610, 1
      %vm615 = vcmp.eq.s32.totalorder %v611, 1
      %vm616 = vcmp.eq.s32.totalorder %v612, 1
      %v617 = vsel %vm613, %v604, 0.0
      %v618 = vsel %vm614, %v603, 0.0
      %v619 = vsel %vm615, %v602, 0.0
      %v620 = vsel %vm616, %v601, 0.0
      %622 = vset.pattern.permute.xlu0 0
      %623 = vperm.xlu0 %622, %v591
      %v624 = vpop.permute.xlu0 %623
      %v626 = vmul.f32 %v617, %v624
      %v627 = vmul.f32 %v618, %v624
      %v628 = vmul.f32 %v619, %v624
      %v629 = vmul.f32 %v620, %v624
      %v630 = vadd.f32 %v626, 0.0
      %v631 = vadd.f32 %v627, 0.0
      %v632 = vadd.f32 %v628, 0.0
      %v633 = vadd.f32 %v629, 0.0
      %634 = vrot.lane.b32.xlu0 %v470, 16
      %v635 = vpop.permute.xlu0 %634
      %636 = vrot.lane.b32.xlu0 %v471, 16
      %v637 = vpop.permute.xlu0 %636
      %638 = vrot.lane.b32.xlu0 %v472, 16
      %v639 = vpop.permute.xlu0 %638
      %640 = vrot.lane.b32.xlu0 %v473, 16
      %v641 = vpop.permute.xlu0 %640
      %vm642 = vcmp.lt.s32.totalorder %v475, 16
      %v643 = vsel %vm642, %v639, %v641
      %v644 = vsel %vm642, %v637, %v639
      %v645 = vsel %vm642, %v635, %v637
      %v646 = vsel %vm642, %v641, %v635
      %v647 = vsel %vm575, 1, 0
      %v648 = vsel %vm576, 1, 0
      %v649 = vsel %vm577, 1, 0
      %v650 = vsel %vm578, 1, 0
      %vm651 = vcmp.eq.s32.totalorder %v647, 1
      %vm652 = vcmp.eq.s32.totalorder %v648, 1
      %vm653 = vcmp.eq.s32.totalorder %v649, 1
      %vm654 = vcmp.eq.s32.totalorder %v650, 1
      %v655 = vsel %vm651, %v646, 0.0
      %v656 = vsel %vm652, %v645, 0.0
      %v657 = vsel %vm653, %v644, 0.0
      %v658 = vsel %vm654, %v643, 0.0
      %659 = vset.pattern.permute.xlu0 1
      %660 = vperm.xlu0 %659, %v591
      %v661 = vpop.permute.xlu0 %660
      %v663 = vmul.f32 %v655, %v661
      %v664 = vmul.f32 %v656, %v661
      %v665 = vmul.f32 %v657, %v661
      %v666 = vmul.f32 %v658, %v661
      %v667 = vadd.f32 %v630, %v663
      %v668 = vadd.f32 %v631, %v664
      %v669 = vadd.f32 %v632, %v665
      %v670 = vadd.f32 %v633, %v666
      %671 = vrot.lane.b32.xlu0 %v470, 15
      %v672 = vpop.permute.xlu0 %671
      %673 = vrot.lane.b32.xlu0 %v471, 15
      %v674 = vpop.permute.xlu0 %673
      %675 = vrot.lane.b32.xlu0 %v472, 15
      %v676 = vpop.permute.xlu0 %675
      %677 = vrot.lane.b32.xlu0 %v473, 15
      %v678 = vpop.permute.xlu0 %677
      %vm679 = vcmp.lt.s32.totalorder %v475, 15
      %v680 = vsel %vm679, %v676, %v678
      %v681 = vsel %vm679, %v674, %v676
      %v682 = vsel %vm679, %v672, %v674
      %v683 = vsel %vm679, %v678, %v672
      %vm684 = vmand %vm575, %vm587
      %vm685 = vmand %vm576, %vm588
      %vm686 = vmand %vm577, %vm589
      %vm687 = vmand %vm578, %vm590
      %v688 = vsel %vm684, 1, 0
      %v689 = vsel %vm685, 1, 0
      %v690 = vsel %vm686, 1, 0
      %v691 = vsel %vm687, 1, 0
      %vm692 = vcmp.eq.s32.totalorder %v688, 1
      %vm693 = vcmp.eq.s32.totalorder %v689, 1
      %vm694 = vcmp.eq.s32.totalorder %v690, 1
      %vm695 = vcmp.eq.s32.totalorder %v691, 1
      %v696 = vsel %vm692, %v683, 0.0
      %v697 = vsel %vm693, %v682, 0.0
      %v698 = vsel %vm694, %v681, 0.0
      %v699 = vsel %vm695, %v680, 0.0
      %700 = vset.pattern.permute.xlu0 2
      %701 = vperm.xlu0 %700, %v591
      %v702 = vpop.permute.xlu0 %701
      %v704 = vmul.f32 %v696, %v702
      %v705 = vmul.f32 %v697, %v702
      %v706 = vmul.f32 %v698, %v702
      %v707 = vmul.f32 %v699, %v702
      %v708 = vadd.f32 %v667, %v704
      %v709 = vadd.f32 %v668, %v705
      %v710 = vadd.f32 %v669, %v706
      %v711 = vadd.f32 %v670, %v707
      %712 = vrot.lane.b32.xlu0 %v470, 1
      %v713 = vpop.permute.xlu0 %712
      %714 = vrot.lane.b32.xlu0 %v471, 1
      %v715 = vpop.permute.xlu0 %714
      %716 = vrot.lane.b32.xlu0 %v472, 1
      %v717 = vpop.permute.xlu0 %716
      %718 = vrot.lane.b32.xlu0 %v473, 1
      %v719 = vpop.permute.xlu0 %718
      %vm720 = vcmp.lt.s32.totalorder %v475, 1
      %v721 = vsel %vm720, %v717, %v719
      %v722 = vsel %vm720, %v715, %v717
      %v723 = vsel %vm720, %v713, %v715
      %v724 = vsel %vm720, %v719, %v713
      %v725 = vsel %vm583, 1, 0
      %v726 = vsel %vm584, 1, 0
      %v727 = vsel %vm585, 1, 0
      %v728 = vsel %vm586, 1, 0
      %vm729 = vcmp.eq.s32.totalorder %v725, 1
      %vm730 = vcmp.eq.s32.totalorder %v726, 1
      %vm731 = vcmp.eq.s32.totalorder %v727, 1
      %vm732 = vcmp.eq.s32.totalorder %v728, 1
      %v733 = vsel %vm729, %v724, 0.0
      %v734 = vsel %vm730, %v723, 0.0
      %v735 = vsel %vm731, %v722, 0.0
      %v736 = vsel %vm732, %v721, 0.0
      %737 = vset.pattern.permute.xlu0 3
      %738 = vperm.xlu0 %737, %v591
      %v739 = vpop.permute.xlu0 %738
      %v741 = vmul.f32 %v733, %v739
      %v742 = vmul.f32 %v734, %v739
      %v743 = vmul.f32 %v735, %v739
      %v744 = vmul.f32 %v736, %v739
      %v745 = vadd.f32 %v708, %v741
      %v746 = vadd.f32 %v709, %v742
      %v747 = vadd.f32 %v710, %v743
      %v748 = vadd.f32 %v711, %v744
      %749 = vset.pattern.permute.xlu0 4
      %750 = vperm.xlu0 %749, %v591
      %v751 = vpop.permute.xlu0 %750
      %v753 = vmul.f32 %v470, %v751
      %v754 = vmul.f32 %v471, %v751
      %v755 = vmul.f32 %v472, %v751
      %v756 = vmul.f32 %v473, %v751
      %v757 = vadd.f32 %v745, %v753
      %v758 = vadd.f32 %v746, %v754
      %v759 = vadd.f32 %v747, %v755
      %v760 = vadd.f32 %v748, %v756
      %761 = vrot.lane.b32.xlu0 %v470, 127
      %v762 = vpop.permute.xlu0 %761
      %763 = vrot.lane.b32.xlu0 %v471, 127
      %v764 = vpop.permute.xlu0 %763
      %765 = vrot.lane.b32.xlu0 %v472, 127
      %v766 = vpop.permute.xlu0 %765
      %767 = vrot.lane.b32.xlu0 %v473, 127
      %v768 = vpop.permute.xlu0 %767
      %vm769 = vcmp.lt.s32.totalorder %v475, 127
      %v770 = vsel %vm769, %v766, %v768
      %v771 = vsel %vm769, %v764, %v766
      %v772 = vsel %vm769, %v762, %v764
      %v773 = vsel %vm769, %v768, %v762
      %v774 = vsel %vm587, 1, 0
      %v775 = vsel %vm588, 1, 0
      %v776 = vsel %vm589, 1, 0
      %v777 = vsel %vm590, 1, 0
      %vm778 = vcmp.eq.s32.totalorder %v774, 1
      %vm779 = vcmp.eq.s32.totalorder %v775, 1
      %vm780 = vcmp.eq.s32.totalorder %v776, 1
      %vm781 = vcmp.eq.s32.totalorder %v777, 1
      %v782 = vsel %vm778, %v772, 0.0
      %v783 = vsel %vm779, %v771, 0.0
      %v784 = vsel %vm780, %v770, 0.0
      %v785 = vsel %vm781, %v773, 0.0
      %786 = vset.pattern.permute.xlu0 5
      %787 = vperm.xlu0 %786, %v591
      %v788 = vpop.permute.xlu0 %787
      %v790 = vmul.f32 %v782, %v788
      %v791 = vmul.f32 %v783, %v788
      %v792 = vmul.f32 %v784, %v788
      %v793 = vmul.f32 %v785, %v788
      %v794 = vadd.f32 %v757, %v790
      %v795 = vadd.f32 %v758, %v791
      %v796 = vadd.f32 %v759, %v792
      %v797 = vadd.f32 %v760, %v793
      %798 = vrot.lane.b32.xlu0 %v470, 113
      %v799 = vpop.permute.xlu0 %798
      %800 = vrot.lane.b32.xlu0 %v471, 113
      %v801 = vpop.permute.xlu0 %800
      %802 = vrot.lane.b32.xlu0 %v472, 113
      %v803 = vpop.permute.xlu0 %802
      %804 = vrot.lane.b32.xlu0 %v473, 113
      %v805 = vpop.permute.xlu0 %804
      %vm806 = vcmp.lt.s32.totalorder %v475, 113
      %v807 = vsel %vm806, %v803, %v805
      %v808 = vsel %vm806, %v801, %v803
      %v809 = vsel %vm806, %v799, %v801
      %v810 = vsel %vm806, %v805, %v799
      %vm811 = vmand %vm579, %vm583
      %vm812 = vmand %vm580, %vm584
      %vm813 = vmand %vm581, %vm585
      %vm814 = vmand %vm582, %vm586
      %v815 = vsel %vm811, 1, 0
      %v816 = vsel %vm812, 1, 0
      %v817 = vsel %vm813, 1, 0
      %v818 = vsel %vm814, 1, 0
      %vm819 = vcmp.eq.s32.totalorder %v815, 1
      %vm820 = vcmp.eq.s32.totalorder %v816, 1
      %vm821 = vcmp.eq.s32.totalorder %v817, 1
      %vm822 = vcmp.eq.s32.totalorder %v818, 1
      %v823 = vsel %vm819, %v809, 0.0
      %v824 = vsel %vm820, %v808, 0.0
      %v825 = vsel %vm821, %v807, 0.0
      %v826 = vsel %vm822, %v810, 0.0
      %827 = vset.pattern.permute.xlu0 6
      %828 = vperm.xlu0 %827, %v591
      %v829 = vpop.permute.xlu0 %828
      %v831 = vmul.f32 %v823, %v829
      %v832 = vmul.f32 %v824, %v829
      %v833 = vmul.f32 %v825, %v829
      %v834 = vmul.f32 %v826, %v829
      %v835 = vadd.f32 %v794, %v831
      %v836 = vadd.f32 %v795, %v832
      %v837 = vadd.f32 %v796, %v833
      %v838 = vadd.f32 %v797, %v834
      %839 = vrot.lane.b32.xlu0 %v470, 112
      %v840 = vpop.permute.xlu0 %839
      %841 = vrot.lane.b32.xlu0 %v471, 112
      %v842 = vpop.permute.xlu0 %841
      %843 = vrot.lane.b32.xlu0 %v472, 112
      %v844 = vpop.permute.xlu0 %843
      %845 = vrot.lane.b32.xlu0 %v473, 112
      %v846 = vpop.permute.xlu0 %845
      %vm847 = vcmp.lt.s32.totalorder %v475, 112
      %v848 = vsel %vm847, %v844, %v846
      %v849 = vsel %vm847, %v842, %v844
      %v850 = vsel %vm847, %v840, %v842
      %v851 = vsel %vm847, %v846, %v840
      %v852 = vsel %vm579, 1, 0
      %v853 = vsel %vm580, 1, 0
      %v854 = vsel %vm581, 1, 0
      %v855 = vsel %vm582, 1, 0
      %vm856 = vcmp.eq.s32.totalorder %v852, 1
      %vm857 = vcmp.eq.s32.totalorder %v853, 1
      %vm858 = vcmp.eq.s32.totalorder %v854, 1
      %vm859 = vcmp.eq.s32.totalorder %v855, 1
      %v860 = vsel %vm856, %v850, 0.0
      %v861 = vsel %vm857, %v849, 0.0
      %v862 = vsel %vm858, %v848, 0.0
      %v863 = vsel %vm859, %v851, 0.0
      %864 = vset.pattern.permute.xlu0 7
      %865 = vperm.xlu0 %864, %v591
      %v866 = vpop.permute.xlu0 %865
      %v868 = vmul.f32 %v860, %v866
      %v869 = vmul.f32 %v861, %v866
      %v870 = vmul.f32 %v862, %v866
      %v871 = vmul.f32 %v863, %v866
      %v872 = vadd.f32 %v835, %v868
      %v873 = vadd.f32 %v836, %v869
      %v874 = vadd.f32 %v837, %v870
      %v875 = vadd.f32 %v838, %v871
      %876 = vrot.lane.b32.xlu0 %v470, 111
      %v877 = vpop.permute.xlu0 %876
      %878 = vrot.lane.b32.xlu0 %v471, 111
      %v879 = vpop.permute.xlu0 %878
      %880 = vrot.lane.b32.xlu0 %v472, 111
      %v881 = vpop.permute.xlu0 %880
      %882 = vrot.lane.b32.xlu0 %v473, 111
      %v883 = vpop.permute.xlu0 %882
      %vm884 = vcmp.lt.s32.totalorder %v475, 111
      %v885 = vsel %vm884, %v881, %v883
      %v886 = vsel %vm884, %v879, %v881
      %v887 = vsel %vm884, %v877, %v879
      %v888 = vsel %vm884, %v883, %v877
      %vm889 = vmand %vm579, %vm587
      %vm890 = vmand %vm580, %vm588
      %vm891 = vmand %vm581, %vm589
      %vm892 = vmand %vm582, %vm590
      %v893 = vsel %vm889, 1, 0
      %v894 = vsel %vm890, 1, 0
      %v895 = vsel %vm891, 1, 0
      %v896 = vsel %vm892, 1, 0
      %vm897 = vcmp.eq.s32.totalorder %v893, 1
      %vm898 = vcmp.eq.s32.totalorder %v894, 1
      %vm899 = vcmp.eq.s32.totalorder %v895, 1
      %vm900 = vcmp.eq.s32.totalorder %v896, 1
      %v901 = vsel %vm897, %v887, 0.0
      %v902 = vsel %vm898, %v886, 0.0
      %v903 = vsel %vm899, %v885, 0.0
      %v904 = vsel %vm900, %v888, 0.0
      %905 = vset.pattern.permute.xlu0 8
      %906 = vperm.xlu0 %905, %v591
      %v907 = vpop.permute.xlu0 %906
      %v909 = vmul.f32 %v901, %v907
      %v910 = vmul.f32 %v902, %v907
      %v911 = vmul.f32 %v903, %v907
      %v912 = vmul.f32 %v904, %v907
      %v913 = vadd.f32 %v872, %v909
      %v914 = vadd.f32 %v873, %v910
      %v915 = vadd.f32 %v874, %v911
      %v916 = vadd.f32 %v875, %v912
      %v917 = vld [vmem:[%s5] sm:$0xf]
      %919 = vset.pattern.permute.xlu0 0
      %920 = vperm.xlu0 %919, %v917
      %v921 = vpop.permute.xlu0 %920
      %v923 = vmul.f32 %v913, %v921
      %v924 = vmul.f32 %v914, %v921
      %v925 = vmul.f32 %v915, %v921
      %v926 = vmul.f32 %v916, %v921
      %v927 = vld [vmem:[%s6] sm:$0xf]
      %929 = vset.pattern.permute.xlu0 0
      %930 = vperm.xlu0 %929, %v927
      %v931 = vpop.permute.xlu0 %930
      %v933 = vadd.f32 %v923, %v931
      %v934 = vadd.f32 %v924, %v931
      %v935 = vadd.f32 %v925, %v931
      %v936 = vadd.f32 %v926, %v931
      %v937 = vmax.f32 %v933, 0.0
      %v938 = vmax.f32 %v934, 0.0
      %v939 = vmax.f32 %v935, 0.0
      %v940 = vmax.f32 %v936, 0.0
      %v945 = vrot.slane %v937, 4
      %v946 = vrot.slane %v938, 4
      %v947 = vrot.slane %v939, 4
      %v948 = vrot.slane %v940, 4
      %v953 = vsel %vm299, %v470, %v945
      %v954 = vsel %vm299, %v471, %v946
      %v955 = vsel %vm299, %v472, %v947
      %v956 = vsel %vm299, %v473, %v948
      %957 = vst [vmem:[%s285] sm:$0xff] %v953
      %958 = vst [vmem:[%s285 + $0x8] sm:$0xff] %v954
      %s959 = scalar_lea.vmem %s285, 16
      %960 = vst [vmem:[%s959] sm:$0xff] %v955
      %961 = vst [vmem:[%s959 + $0x8] sm:$0xff] %v956
      %s962 = smul.u32 2, %s18
      %p963 = scmp.lt.s32.totalorder %s962, 3
      %s964 = scalar_select %p963, %s962, 3
      %s965 = smul.addr %s964, 2
      %s966 = smul.addr %s965, 8
      %s967 = scalar_lea.vmem %s7, %s966
      // Predicated region
      $region49: #{ghost_module_forward.1} parent=47 // pred_check
        %p968 = pneg %p188
      $region50: #{ghost_module_forward.1} parent=47 // pred_check_branch
        %970 = sbr.rel (%p968) target = $region52
      $region51: #{ghost_module_forward.1} parent=47 // pred_region
        %s971 = smul.u32 2, %s18
      $region52: #{ghost_module_forward.1} parent=47 // pred_fallthru
        _
    $region48: #{ghost_module_forward.1} parent=5 // pred_fallthru
      _
    %p972 = scmp.le.s32.totalorder 2, %s13
    // Predicated region
    $region53: #{ghost_module_forward.1} parent=5 // pred_check
      %p973 = pneg %p972
    $region54: #{ghost_module_forward.1} parent=5 // pred_check_branch
      %975 = sbr.rel (%p973) target = $region56
    $region55: #{ghost_module_forward.1} parent=5 // pred_region
      %s976 = ssub.s32 %s13, 2
      // Predicated region
      $region57: #{ghost_module_forward.1} parent=55 // pred_check
        %p977 = pneg %p194
      $region58: #{ghost_module_forward.1} parent=55 // pred_check_branch
        %979 = sbr.rel (%p977) target = $region60
      $region59: #{ghost_module_forward.1} parent=55 // pred_region
        %s980 = smul.u32 2, %s19
        %p981 = scmp.lt.s32.totalorder %s980, 3
        %s982 = scalar_select %p981, %s980, 3
        %s983 = smul.addr %s982, 2
        %s984 = smul.addr %s983, 8
        %s985 = scalar_lea.vmem %s7, %s984
      $region60: #{ghost_module_forward.1} parent=55 // pred_fallthru
        _
    $region56: #{ghost_module_forward.1} parent=5 // pred_fallthru
      _
  $region6: #{ghost_module_forward.1} parent=0 // loop_footer
    %s17 = sadd.s32 1, %s13
  $region7: #{ghost_module_forward.1} parent=0 // loop_footer_branch
    %12 = sbr.rel target = $region3
  $region8: #{ghost_module_forward.1} parent=0 // loop_exit
    _

</llo_original>
